<compile_context>
chip_gen: v6e
topology: v6e:2x2x1
jax: 0.10.0
libtpu: 0.0.40
codegen_flags: <defaults>
</compile_context>

<pallas_src>
import functools

import jax
import jax.numpy as jnp
from jax.experimental import pallas as pl
from jax.experimental.pallas import tpu as pltpu


def _round_up(x, m):
    return ((x + m - 1) // m) * m


def _pmf_error_kernel(u_ref, vt_ref, m_ref, out_ref):
    """One (tm x tn) tile of the masked squared-error reduction.

    u_ref  : (tm, L)     user-feature tile
    vt_ref : (L, tn)     movie-feature tile (already transposed, lane-dense)
    m_ref  : (tm, tn)    rating-matrix tile
    out_ref: (1, 8, tn)  per-user-tile vector accumulator, resident across j
    """
    j = pl.program_id(1)

    @pl.when(j == 0)
    def _():
        out_ref[...] = jnp.zeros_like(out_ref)

    # scores tile = U_tile @ V_tile  -> (tm, tn), f32 accumulation on the MXU.
    scores = jnp.dot(u_ref[...], vt_ref[...], preferred_element_type=jnp.float32)
    pred = jax.nn.sigmoid(scores)

    mat = m_ref[...]
    err = jnp.where(mat != jnp.float32(-1.0), (mat - pred) ** 2, jnp.float32(0.0))

    # Fold (tm, tn) -> (8, tn) with pure vreg adds (no XLU, no SMEM round-trip).
    tm, tn = err.shape
    folded = jnp.sum(err.reshape(tm // 8, 8, tn), axis=0)
    out_ref[...] += folded[None]


def pmf_prediction_error(user_features, movie_features, matrix, *, tm=256, tn=512):
    n_users, latent = user_features.shape
    n_movies, latent_v = movie_features.shape
    assert latent_v == latent
    assert matrix.shape == (n_users, n_movies)

    user_features = user_features.astype(jnp.float32)
    movie_features = movie_features.astype(jnp.float32)
    matrix = matrix.astype(jnp.float32)

    # Effective tile sizes: respect (8, 128) minimums, don't exceed the
    # (rounded-up) problem size.
    tm_eff = min(tm, _round_up(n_users, 8))
    tn_eff = min(tn, _round_up(n_movies, 128))

    pad_u = _round_up(n_users, tm_eff) - n_users
    pad_m = _round_up(n_movies, tn_eff) - n_movies
    if pad_u:
        user_features = jnp.pad(user_features, ((0, pad_u), (0, 0)))
    if pad_m:
        movie_features = jnp.pad(movie_features, ((0, pad_m), (0, 0)))
    if pad_u or pad_m:
        # Padded ratings are -1 -> masked out inside the kernel.
        matrix = jnp.pad(
            matrix, ((0, pad_u), (0, pad_m)), constant_values=jnp.float32(-1.0)
        )

    mu, mn = matrix.shape
    vt = movie_features.T  # (latent, mn): lane-dense along movies.

    grid_i = mu // tm_eff
    grid_j = mn // tn_eff

    partials = pl.pallas_call(
        _pmf_error_kernel,
        out_shape=jax.ShapeDtypeStruct((grid_i, 8, tn_eff), jnp.float32),
        grid_spec=pltpu.PrefetchScalarGridSpec(
            num_scalar_prefetch=0,
            grid=(grid_i, grid_j),
            in_specs=[
                pl.BlockSpec((tm_eff, latent), lambda i, j: (i, 0)),  # U tile
                pl.BlockSpec((latent, tn_eff), lambda i, j: (0, j)),  # V^T tile
                pl.BlockSpec((tm_eff, tn_eff), lambda i, j: (i, j)),  # matrix tile
            ],
            # Per-i partial accumulator, resident across the movie axis.
            out_specs=pl.BlockSpec((1, 8, tn_eff), lambda i, j: (i, 0, 0)),
        ),
        compiler_params=pltpu.CompilerParams(
            # user axis is independent -> shardable across TCs (v7x megacore);
            # movie axis carries the accumulation -> sequential.
            dimension_semantics=("parallel", "arbitrary"),
        ),
    )(user_features, vt, matrix)

    return jnp.sum(partials)


def pmf_forward(user_features, movie_features, matrix, lam_u=0.3, lam_v=0.3,
                *, tm=256, tn=512):
    """Total PMF loss (explicit=True branch of the PyTorch module)."""
    prediction_error = pmf_prediction_error(
        user_features, movie_features, matrix, tm=tm, tn=tn
    )
    # Tiny L2 regularization terms: plain-JAX glue (negligible compute).
    u_reg = lam_u * jnp.sum(jnp.linalg.norm(user_features, axis=1))
    v_reg = lam_v * jnp.sum(jnp.linalg.norm(movie_features, axis=1))
    return prediction_error + u_reg + v_reg


def _reference_forward(user_features, movie_features, matrix, lam_u=0.3, lam_v=0.3):
    mask = (matrix != -1.0).astype(jnp.float32)
    scores = user_features @ movie_features.T
    pred = jax.nn.sigmoid(scores)
    err = jnp.sum(((matrix - pred) ** 2) * mask)
    u_reg = lam_u * jnp.sum(jnp.linalg.norm(user_features, axis=1))
    v_reg = lam_v * jnp.sum(jnp.linalg.norm(movie_features, axis=1))
    return err + u_reg + v_reg


if __name__ == "__main__":
    # Small, deliberately non-aligned shapes to exercise the padding path.
    n_users, n_movies, latent = 20, 300, 8
    lam_u, lam_v = 0.3, 0.3

    key = jax.random.PRNGKey(0)
    k_u, k_v, k_r, k_m = jax.random.split(key, 4)

    # Deterministic parameter init mirroring torch.randn(...) * 0.01
    user_features = 0.01 * jax.random.normal(k_u, (n_users, latent), jnp.float32)
    movie_features = 0.01 * jax.random.normal(k_v, (n_movies, latent), jnp.float32)

    # Rating matrix: normalized ratings in [0, 1], ~50% entries missing (= -1).
    ratings = jax.random.uniform(k_r, (n_users, n_movies), jnp.float32)
    missing = jax.random.bernoulli(k_m, 0.5, (n_users, n_movies))
    matrix = jnp.where(missing, jnp.float32(-1.0), ratings)

    ref = _reference_forward(user_features, movie_features, matrix, lam_u, lam_v)

    # Default (large-tile) configuration.
    loss = jax.jit(functools.partial(pmf_forward, lam_u=lam_u, lam_v=lam_v))(
        user_features, movie_features, matrix
    )
    loss = jax.block_until_ready(loss)
    assert jnp.allclose(loss, ref, rtol=1e-5, atol=1e-5), (loss, ref)

    # Small-tile configuration: exercises a multi-step (3 x 3) grid with
    # resident accumulation along the movie axis and per-i partial outputs.
    loss_multi = jax.jit(
        functools.partial(pmf_forward, lam_u=lam_u, lam_v=lam_v, tm=8, tn=128)
    )(user_features, movie_features, matrix)
    loss_multi = jax.block_until_ready(loss_multi)
    assert jnp.allclose(loss_multi, ref, rtol=1e-5, atol=1e-5), (loss_multi, ref)

    print("KERNEL_OK")
</pallas_src>

<mosaic_0001>
module attributes {stable_mosaic.version = 11 : i64} {
  func.func @_pmf_error_kernel(%arg0: i32, %arg1: i32, %arg2: memref<24x8xf32, #tpu.memory_space<vmem>>, %arg3: memref<8x384xf32, #tpu.memory_space<vmem>>, %arg4: memref<24x384xf32, #tpu.memory_space<vmem>>, %arg5: memref<1x8x384xf32, #tpu.memory_space<vmem>>) attributes {dimension_semantics = [#tpu.dimension_semantics<parallel>, #tpu.dimension_semantics<arbitrary>], iteration_bounds = array<i64: 1, 1>, scalar_prefetch = 0 : i64, scratch_operands = 0 : i64, tpu.core_type = #tpu.core_type<tc>, window_params = [{transform_indices = @transform_0, window_bounds = array<i64: 24, 8>}, {transform_indices = @transform_1, window_bounds = array<i64: 8, 384>}, {transform_indices = @transform_2, window_bounds = array<i64: 24, 384>}, {transform_indices = @transform_3, window_bounds = array<i64: 1, 8, 384>}]} {
    %c0_i32 = arith.constant 0 : i32
    %0 = arith.cmpi eq, %arg1, %c0_i32 : i32
    %1 = arith.extui %0 : i1 to i32
    %c0_i32_0 = arith.constant 0 : i32
    %2 = arith.cmpi ne, %1, %c0_i32_0 : i32
    scf.if %2 {
      %cst_16 = arith.constant 0.000000e+00 : f32
      %24 = vector.broadcast %cst_16 : f32 to vector<1x8x384xf32>
      %c0_17 = arith.constant 0 : index
      %c0_18 = arith.constant 0 : index
      %c0_19 = arith.constant 0 : index
      %25 = vector.load %arg5[%c0_17, %c0_18, %c0_19] : memref<1x8x384xf32, #tpu.memory_space<vmem>>, vector<1x8x384xf32>
      tpu.vector_store %arg5[%c0_17, %c0_18, %c0_19], %24 {strides = array<i32>} : memref<1x8x384xf32, #tpu.memory_space<vmem>>, vector<1x8x384xf32>,
    } else {
    }
    %c0 = arith.constant 0 : index
    %c0_1 = arith.constant 0 : index
    %3 = vector.load %arg2[%c0, %c0_1] : memref<24x8xf32, #tpu.memory_space<vmem>>, vector<24x8xf32>
    %c0_2 = arith.constant 0 : index
    %c0_3 = arith.constant 0 : index
    %4 = vector.load %arg3[%c0_2, %c0_3] : memref<8x384xf32, #tpu.memory_space<vmem>>, vector<8x384xf32>
    %cst = arith.constant dense<0.000000e+00> : vector<24x384xf32>
    %5 = tpu.matmul %3, %4, %cst {dimension_numbers = #tpu.dot_dimension_numbers<[1], [0], [0], [1], [0, 0, 1, 1], [], []>} : vector<24x8xf32>, vector<8x384xf32>, vector<24x384xf32> -> vector<24x384xf32>
    %6 = arith.negf %5 : vector<24x384xf32>
    %7 = math.exp %6 : vector<24x384xf32>
    %cst_4 = arith.constant 1.000000e+00 : f32
    %8 = vector.broadcast %cst_4 : f32 to vector<24x384xf32>
    %9 = arith.addf %8, %7 : vector<24x384xf32>
    %10 = arith.divf %8, %9 : vector<24x384xf32>
    %c0_5 = arith.constant 0 : index
    %c0_6 = arith.constant 0 : index
    %11 = vector.load %arg4[%c0_5, %c0_6] : memref<24x384xf32, #tpu.memory_space<vmem>>, vector<24x384xf32>
    %cst_7 = arith.constant -1.000000e+00 : f32
    %12 = vector.broadcast %cst_7 : f32 to vector<24x384xf32>
    %13 = arith.cmpf one, %11, %12 : vector<24x384xf32>
    %14 = arith.subf %11, %10 : vector<24x384xf32>
    %15 = arith.mulf %14, %14 : vector<24x384xf32>
    %cst_8 = arith.constant 0.000000e+00 : f32
    %16 = vector.broadcast %cst_8 : f32 to vector<24x384xf32>
    %17 = arith.select %13, %15, %16 : vector<24x384xi1>, vector<24x384xf32>
    %18 = vector.shape_cast %17 : vector<24x384xf32> to vector<3x8x384xf32>
    %cst_9 = arith.constant dense<0.000000e+00> : vector<8x384xf32>
    %19 = vector.multi_reduction <add>, %18, %cst_9 [0] : vector<3x8x384xf32> to vector<8x384xf32>
    %c0_10 = arith.constant 0 : index
    %c0_11 = arith.constant 0 : index
    %c0_12 = arith.constant 0 : index
    %20 = vector.load %arg5[%c0_10, %c0_11, %c0_12] : memref<1x8x384xf32, #tpu.memory_space<vmem>>, vector<1x8x384xf32>
    %21 = vector.shape_cast %19 : vector<8x384xf32> to vector<1x8x384xf32>
    %22 = arith.addf %20, %21 : vector<1x8x384xf32>
    %c0_13 = arith.constant 0 : index
    %c0_14 = arith.constant 0 : index
    %c0_15 = arith.constant 0 : index
    %23 = vector.load %arg5[%c0_13, %c0_14, %c0_15] : memref<1x8x384xf32, #tpu.memory_space<vmem>>, vector<1x8x384xf32>
    tpu.vector_store %arg5[%c0_13, %c0_14, %c0_15], %22 {strides = array<i32>} : memref<1x8x384xf32, #tpu.memory_space<vmem>>, vector<1x8x384xf32>,
    return
  }
  func.func @transform_0(%arg0: i32, %arg1: i32) -> (i32, i32) {
    %c0_i32 = arith.constant 0 : i32
    %c0_i32_0 = arith.constant 0 : i32
    return %arg0, %c0_i32 : i32, i32
  }
  func.func @transform_1(%arg0: i32, %arg1: i32) -> (i32, i32) {
    %c0_i32 = arith.constant 0 : i32
    %c0_i32_0 = arith.constant 0 : i32
    return %c0_i32, %arg1 : i32, i32
  }
  func.func @transform_2(%arg0: i32, %arg1: i32) -> (i32, i32) {
    %c0_i32 = arith.constant 0 : i32
    return %arg0, %arg1 : i32, i32
  }
  func.func @transform_3(%arg0: i32, %arg1: i32) -> (i32, i32, i32) {
    %c0_i32 = arith.constant 0 : i32
    %c0_i32_0 = arith.constant 0 : i32
    %c0_i32_1 = arith.constant 0 : i32
    return %arg0, %c0_i32, %c0_i32_0 : i32, i32, i32
  }
}

</mosaic_0001>

<llo_original>
// kernel: pmf_forward.1
$region0: #{pmf_forward.1}
  #allocation0 [shape = 'u32[]', space=smem, size = 0x4, offset = 0x4, fixed_abs, tag = 'smem constant byte address 0x4 - core index']
  #allocation1 [shape = 'u32[144,128]{1,0:T(1,128)}', space=vmem, size = 0x12000, scoped, tag = 'internal scratch']
  %s0 = inlined_call_operand.vmem [shape: f32[24,8], index: 0, kind: input, shape index: {}]
  %s1 = inlined_call_operand.vmem [shape: f32[8,384], index: 1, kind: input, shape index: {}]
  %s2 = inlined_call_operand.vmem [shape: f32[24,384], index: 2, kind: input, shape index: {}]
  %s3 = inlined_call_operand.vmem [shape: f32[1,8,384], index: 3, kind: output, shape index: {}]
  %s4 = sld [smem:[#allocation0]]
  $region26: #{pmf_forward.1} parent=0
    _
  %s6 = ssub.s32 1, %s4
  %s7 = scalar_select 0, %s6, %s4
  // Predicated region
  $region2: #{pmf_forward.1} parent=0 // pred_check
    _
  $region3: #{pmf_forward.1} parent=0 // pred_check_branch
    %9 = sbr.rel (0) target = $region5
  $region4: #{pmf_forward.1} parent=0 // pred_region
    _
  $region5: #{pmf_forward.1} parent=0 // pred_fallthru
    _
  // Predicated region
  $region6: #{pmf_forward.1} parent=0 // pred_check
    _
  $region7: #{pmf_forward.1} parent=0 // pred_check_branch
    %11 = sbr.rel (0) target = $region9
  $region8: #{pmf_forward.1} parent=0 // pred_region
    _
  $region9: #{pmf_forward.1} parent=0 // pred_fallthru
    _
  // Predicated region
  $region10: #{pmf_forward.1} parent=0 // pred_check
    _
  $region11: #{pmf_forward.1} parent=0 // pred_check_branch
    %13 = sbr.rel (0) target = $region13
  $region12: #{pmf_forward.1} parent=0 // pred_region
    _
  $region13: #{pmf_forward.1} parent=0 // pred_fallthru
    _
  %p14 = scmp.eq.s32.totalorder 0, 0
  // Predicated region
  $region14: #{pmf_forward.1} parent=0 // pred_check
    %p15 = pneg %p14
  $region15: #{pmf_forward.1} parent=0 // pred_check_branch
    %17 = sbr.rel (%p15) target = $region17
  $region16: #{pmf_forward.1} parent=0 // pred_region
    %18 = vst [vmem:[%s3] sm:$0xff] 0.0
    %19 = vst [vmem:[%s3 + $0x8] sm:$0xff] 0.0
    %20 = vst [vmem:[%s3 + $0x10] sm:$0xff] 0.0
  $region17: #{pmf_forward.1} parent=0 // pred_fallthru
    _
  %v21 = vld [vmem:[%s0] sm:$0xff]
  %v22 = vld [vmem:[%s0 + $0x8] sm:$0xff]
  %v23 = vld [vmem:[%s0 + $0x10] sm:$0xff]
  %v24 = vld [vmem:[%s1] sm:$0xff]
  %v25 = vld [vmem:[%s1 + $0x8] sm:$0xff]
  %v26 = vld [vmem:[%s1 + $0x10] sm:$0xff]
  %vm27 = vcmask 64512
  %v29 = vsel %vm27, %v21, 0
  %v32 = vsel %vm27, %v22, 0
  %v35 = vsel %vm27, %v23, 0
  %37 = vmatprep.subr.mxu0 0.0
  %38 = vmatpush1.msra.mxu0 0.0
  %39 = vmatprep.subr.mxu0 0.0
  %40 = vmatpush1.msra.mxu0 0.0
  %41 = vmatprep.subr.mxu0 0.0
  %42 = vmatpush1.msra.mxu0 0.0
  %43 = vmatprep.subr.mxu0 0.0
  %44 = vmatpush1.msra.mxu0 0.0
  %45 = vmatprep.subr.mxu0 0.0
  %46 = vmatpush1.msra.mxu0 0.0
  %47 = vmatprep.subr.mxu0 0.0
  %48 = vmatpush1.msra.mxu0 0.0
  %49 = vmatprep.subr.mxu0 0.0
  %50 = vmatpush1.msra.mxu0 0.0
  %51 = vmatprep.subr.mxu0 0.0
  %52 = vmatpush1.msra.mxu0 0.0
  %53 = vmatprep.subr.mxu0 0.0
  %54 = vmatpush1.msra.mxu0 0.0
  %55 = vmatprep.subr.mxu0 0.0
  %56 = vmatpush1.msra.mxu0 0.0
  %57 = vmatprep.subr.mxu0 0.0
  %58 = vmatpush1.msra.mxu0 0.0
  %59 = vmatprep.subr.mxu0 0.0
  %60 = vmatpush1.msra.mxu0 0.0
  %61 = vmatprep.subr.mxu0 0.0
  %62 = vmatpush1.msra.mxu0 0.0
  %63 = vmatprep.subr.mxu0 0.0
  %64 = vmatpush1.msra.mxu0 0.0
  %65 = vmatprep.subr.mxu0 0.0
  %66 = vmatpush1.msra.mxu0 0.0
  %67 = vmatprep.subr.mxu0 %v25
  %68 = vmatpush1.msra.mxu0 %v24
  %69 = vmatprep.subr.mxu0 0.0
  %70 = vmatpush2.msra.mxu0 0.0
  %71 = vmatprep.subr.mxu0 0.0
  %72 = vmatpush2.msra.mxu0 0.0
  %73 = vmatprep.subr.mxu0 0.0
  %74 = vmatpush2.msra.mxu0 0.0
  %75 = vmatprep.subr.mxu0 0.0
  %76 = vmatpush2.msra.mxu0 0.0
  %77 = vmatprep.subr.mxu0 0.0
  %78 = vmatpush2.msra.mxu0 0.0
  %79 = vmatprep.subr.mxu0 0.0
  %80 = vmatpush2.msra.mxu0 0.0
  %81 = vmatprep.subr.mxu0 0.0
  %82 = vmatpush2.msra.mxu0 0.0
  %83 = vmatprep.subr.mxu0 0.0
  %84 = vmatpush2.msra.mxu0 0.0
  %85 = vmatprep.subr.mxu0 0.0
  %86 = vmatpush2.msra.mxu0 0.0
  %87 = vmatprep.subr.mxu0 0.0
  %88 = vmatpush2.msra.mxu0 0.0
  %89 = vmatprep.subr.mxu0 0.0
  %90 = vmatpush2.msra.mxu0 0.0
  %91 = vmatprep.subr.mxu0 0.0
  %92 = vmatpush2.msra.mxu0 0.0
  %93 = vmatprep.subr.mxu0 0.0
  %94 = vmatpush2.msra.mxu0 0.0
  %95 = vmatprep.subr.mxu0 0.0
  %96 = vmatpush2.msra.mxu0 0.0
  %97 = vmatprep.subr.mxu0 0.0
  %98 = vmatpush2.msra.mxu0 0.0
  %99 = vmatprep.subr.mxu0 0.0
  %100 = vmatpush2.msra.mxu0 0.0
  %101 = vmatprep.mubr.f32.mxu0 0.0
  %102 = vmatmul.mubr.f32.gmra.mxu0 %v29
  %v103 = vpop.f32.mrf.mxu0
  %v104 = vadd.f32 0.0, %v103
  %v105 = vpop.f32.mrf.mxu0
  %v106 = vadd.f32 0.0, %v105
  %107 = vmatprep.mubr.f32.mxu0 0.0
  %108 = vmatmul.mubr.f32.gmra.mxu0 %v32
  %v109 = vpop.f32.mrf.mxu0
  %v110 = vadd.f32 0.0, %v109
  %v111 = vpop.f32.mrf.mxu0
  %v112 = vadd.f32 0.0, %v111
  %113 = vmatprep.mubr.f32.mxu0 0.0
  %114 = vmatmul.mubr.f32.gmra.mxu0 %v35
  %v115 = vpop.f32.mrf.mxu0
  %v116 = vadd.f32 0.0, %v115
  %v117 = vpop.f32.mrf.mxu0
  %v118 = vadd.f32 0.0, %v117
  %119 = vdwg.mxu0
  %120 = vmatprep.subr.mxu0 0.0
  %121 = vmatpush1.msra.mxu0 0.0
  %122 = vmatprep.subr.mxu0 0.0
  %123 = vmatpush1.msra.mxu0 0.0
  %124 = vmatprep.subr.mxu0 0.0
  %125 = vmatpush1.msra.mxu0 0.0
  %126 = vmatprep.subr.mxu0 0.0
  %127 = vmatpush1.msra.mxu0 0.0
  %128 = vmatprep.subr.mxu0 0.0
  %129 = vmatpush1.msra.mxu0 0.0
  %130 = vmatprep.subr.mxu0 0.0
  %131 = vmatpush1.msra.mxu0 0.0
  %132 = vmatprep.subr.mxu0 0.0
  %133 = vmatpush1.msra.mxu0 0.0
  %134 = vmatprep.subr.mxu0 0.0
  %135 = vmatpush1.msra.mxu0 0.0
  %136 = vmatprep.subr.mxu0 0.0
  %137 = vmatpush1.msra.mxu0 0.0
  %138 = vmatprep.subr.mxu0 0.0
  %139 = vmatpush1.msra.mxu0 0.0
  %140 = vmatprep.subr.mxu0 0.0
  %141 = vmatpush1.msra.mxu0 0.0
  %142 = vmatprep.subr.mxu0 0.0
  %143 = vmatpush1.msra.mxu0 0.0
  %144 = vmatprep.subr.mxu0 0.0
  %145 = vmatpush1.msra.mxu0 0.0
  %146 = vmatprep.subr.mxu0 0.0
  %147 = vmatpush1.msra.mxu0 0.0
  %148 = vmatprep.subr.mxu0 0.0
  %149 = vmatpush1.msra.mxu0 0.0
  %150 = vmatprep.subr.mxu0 0.0
  %151 = vmatpush1.msra.mxu0 %v26
  %152 = vmatprep.subr.mxu0 0.0
  %153 = vmatpush2.msra.mxu0 0.0
  %154 = vmatprep.subr.mxu0 0.0
  %155 = vmatpush2.msra.mxu0 0.0
  %156 = vmatprep.subr.mxu0 0.0
  %157 = vmatpush2.msra.mxu0 0.0
  %158 = vmatprep.subr.mxu0 0.0
  %159 = vmatpush2.msra.mxu0 0.0
  %160 = vmatprep.subr.mxu0 0.0
  %161 = vmatpush2.msra.mxu0 0.0
  %162 = vmatprep.subr.mxu0 0.0
  %163 = vmatpush2.msra.mxu0 0.0
  %164 = vmatprep.subr.mxu0 0.0
  %165 = vmatpush2.msra.mxu0 0.0
  %166 = vmatprep.subr.mxu0 0.0
  %167 = vmatpush2.msra.mxu0 0.0
  %168 = vmatprep.subr.mxu0 0.0
  %169 = vmatpush2.msra.mxu0 0.0
  %170 = vmatprep.subr.mxu0 0.0
  %171 = vmatpush2.msra.mxu0 0.0
  %172 = vmatprep.subr.mxu0 0.0
  %173 = vmatpush2.msra.mxu0 0.0
  %174 = vmatprep.subr.mxu0 0.0
  %175 = vmatpush2.msra.mxu0 0.0
  %176 = vmatprep.subr.mxu0 0.0
  %177 = vmatpush2.msra.mxu0 0.0
  %178 = vmatprep.subr.mxu0 0.0
  %179 = vmatpush2.msra.mxu0 0.0
  %180 = vmatprep.subr.mxu0 0.0
  %181 = vmatpush2.msra.mxu0 0.0
  %182 = vmatprep.subr.mxu0 0.0
  %183 = vmatpush2.msra.mxu0 0.0
  %184 = vmatprep.mubr.f32.mxu0 0.0
  %185 = vmatmul.mubr.f32.gmra.mxu0 %v29
  %v186 = vpop.f32.mrf.mxu0
  %v187 = vadd.f32 0.0, %v186
  %v188 = vpop.f32.mrf.mxu0
  %189 = vmatprep.mubr.f32.mxu0 0.0
  %190 = vmatmul.mubr.f32.gmra.mxu0 %v32
  %v191 = vpop.f32.mrf.mxu0
  %v192 = vadd.f32 0.0, %v191
  %v193 = vpop.f32.mrf.mxu0
  %194 = vmatprep.mubr.f32.mxu0 0.0
  %195 = vmatmul.mubr.f32.gmra.mxu0 %v35
  %v196 = vpop.f32.mrf.mxu0
  %v197 = vadd.f32 0.0, %v196
  %v198 = vpop.f32.mrf.mxu0
  %199 = vdwg.mxu0
  %v200 = vxor.u32 %v104, 2147483648
  %v201 = vxor.u32 %v106, 2147483648
  %v202 = vxor.u32 %v187, 2147483648
  %v203 = vxor.u32 %v110, 2147483648
  %v204 = vxor.u32 %v112, 2147483648
  %v205 = vxor.u32 %v192, 2147483648
  %v206 = vxor.u32 %v116, 2147483648
  %v207 = vxor.u32 %v118, 2147483648
  %v208 = vxor.u32 %v197, 2147483648
  %v209 = vmul.f32 %v200, 1.442695
  %v210 = vpow.pop %v209
  %v211 = vmul.f32 %v201, 1.442695
  %v212 = vpow.pop %v211
  %v213 = vmul.f32 %v202, 1.442695
  %v214 = vpow.pop %v213
  %v215 = vmul.f32 %v203, 1.442695
  %v216 = vpow.pop %v215
  %v217 = vmul.f32 %v204, 1.442695
  %v218 = vpow.pop %v217
  %v219 = vmul.f32 %v205, 1.442695
  %v220 = vpow.pop %v219
  %v221 = vmul.f32 %v206, 1.442695
  %v222 = vpow.pop %v221
  %v223 = vmul.f32 %v207, 1.442695
  %v224 = vpow.pop %v223
  %v225 = vmul.f32 %v208, 1.442695
  %v226 = vpow.pop %v225
  %v227 = vadd.f32 %v210, 1.0
  %v228 = vadd.f32 %v212, 1.0
  %v229 = vadd.f32 %v214, 1.0
  %v230 = vadd.f32 %v216, 1.0
  %v231 = vadd.f32 %v218, 1.0
  %v232 = vadd.f32 %v220, 1.0
  %v233 = vadd.f32 %v222, 1.0
  %v234 = vadd.f32 %v224, 1.0
  %v235 = vadd.f32 %v226, 1.0
  %v236 = vrcp.pop %v227
  %v237 = vmul.f32 1.0, %v236
  %v238 = vrcp.pop %v228
  %v239 = vmul.f32 1.0, %v238
  %v240 = vrcp.pop %v229
  %v241 = vmul.f32 1.0, %v240
  %v242 = vrcp.pop %v230
  %v243 = vmul.f32 1.0, %v242
  %v244 = vrcp.pop %v231
  %v245 = vmul.f32 1.0, %v244
  %v246 = vrcp.pop %v232
  %v247 = vmul.f32 1.0, %v246
  %v248 = vrcp.pop %v233
  %v249 = vmul.f32 1.0, %v248
  %v250 = vrcp.pop %v234
  %v251 = vmul.f32 1.0, %v250
  %v252 = vrcp.pop %v235
  %v253 = vmul.f32 1.0, %v252
  %v254 = vld [vmem:[%s2] sm:$0xff]
  %v255 = vld [vmem:[%s2 + $0x8] sm:$0xff]
  %v256 = vld [vmem:[%s2 + $0x10] sm:$0xff]
  %v257 = vld [vmem:[%s2 + $0x18] sm:$0xff]
  %v258 = vld [vmem:[%s2 + $0x20] sm:$0xff]
  %v259 = vld [vmem:[%s2 + $0x28] sm:$0xff]
  %v260 = vld [vmem:[%s2 + $0x30] sm:$0xff]
  %v261 = vld [vmem:[%s2 + $0x38] sm:$0xff]
  %v262 = vld [vmem:[%s2 + $0x40] sm:$0xff]
  %vm263 = vcmp.ne.f32.partialorder %v254, -1.0
  %vm264 = vcmp.ne.f32.partialorder %v255, -1.0
  %vm265 = vcmp.ne.f32.partialorder %v256, -1.0
  %vm266 = vcmp.ne.f32.partialorder %v257, -1.0
  %vm267 = vcmp.ne.f32.partialorder %v258, -1.0
  %vm268 = vcmp.ne.f32.partialorder %v259, -1.0
  %vm269 = vcmp.ne.f32.partialorder %v260, -1.0
  %vm270 = vcmp.ne.f32.partialorder %v261, -1.0
  %vm271 = vcmp.ne.f32.partialorder %v262, -1.0
  %v272 = vsub.f32 %v254, %v237
  %v273 = vsub.f32 %v255, %v239
  %v274 = vsub.f32 %v256, %v241
  %v275 = vsub.f32 %v257, %v243
  %v276 = vsub.f32 %v258, %v245
  %v277 = vsub.f32 %v259, %v247
  %v278 = vsub.f32 %v260, %v249
  %v279 = vsub.f32 %v261, %v251
  %v280 = vsub.f32 %v262, %v253
  %v281 = vmul.f32 %v272, %v272
  %v282 = vmul.f32 %v273, %v273
  %v283 = vmul.f32 %v274, %v274
  %v284 = vmul.f32 %v275, %v275
  %v285 = vmul.f32 %v276, %v276
  %v286 = vmul.f32 %v277, %v277
  %v287 = vmul.f32 %v278, %v278
  %v288 = vmul.f32 %v279, %v279
  %v289 = vmul.f32 %v280, %v280
  %v290 = vsel %vm263, %v281, 0.0
  %v291 = vsel %vm264, %v282, 0.0
  %v292 = vsel %vm265, %v283, 0.0
  %v293 = vsel %vm266, %v284, 0.0
  %v294 = vsel %vm267, %v285, 0.0
  %v295 = vsel %vm268, %v286, 0.0
  %v296 = vsel %vm269, %v287, 0.0
  %v297 = vsel %vm270, %v288, 0.0
  %v298 = vsel %vm271, %v289, 0.0
  %v299 = vadd.f32 %v290, %v293
  %v300 = vadd.f32 %v299, %v296
  %v301 = vadd.f32 %v291, %v294
  %v302 = vadd.f32 %v301, %v297
  %v303 = vadd.f32 %v292, %v295
  %v304 = vadd.f32 %v303, %v298
  %v305 = vld [vmem:[%s3] sm:$0xff]
  %v306 = vld [vmem:[%s3 + $0x8] sm:$0xff]
  %v307 = vld [vmem:[%s3 + $0x10] sm:$0xff]
  %v308 = vadd.f32 %v305, %v300
  %v309 = vadd.f32 %v306, %v302
  %v310 = vadd.f32 %v307, %v304
  %311 = vst [vmem:[%s3] sm:$0xff] %v308
  %312 = vst [vmem:[%s3 + $0x8] sm:$0xff] %v309
  %313 = vst [vmem:[%s3 + $0x10] sm:$0xff] %v310
  // Predicated region
  $region18: #{pmf_forward.1} parent=0 // pred_check
    _
  $region19: #{pmf_forward.1} parent=0 // pred_check_branch
    %315 = sbr.rel (0) target = $region21
  $region20: #{pmf_forward.1} parent=0 // pred_region
    _
  $region21: #{pmf_forward.1} parent=0 // pred_fallthru
    _
  // Predicated region
  $region22: #{pmf_forward.1} parent=0 // pred_check
    _
  $region23: #{pmf_forward.1} parent=0 // pred_check_branch
    %317 = sbr.rel (0) target = $region25
  $region24: #{pmf_forward.1} parent=0 // pred_region
    _
  $region25: #{pmf_forward.1} parent=0 // pred_fallthru
    _

</llo_original>
